<compile_context>
chip_gen: v6e
topology: v6e:2x2x1
jax: 0.10.0
libtpu: 0.0.40
codegen_flags: <defaults>
</compile_context>

<pallas_src>
import functools
import numpy as np
import jax
import jax.numpy as jnp
from jax.experimental import pallas as pl
from jax.experimental.pallas import tpu as pltpu


def _round_up(x, m):
    return ((x + m - 1) // m) * m


# ----------------------------- Pallas kernel --------------------------------

def _matcher_cost_kernel(a_ref, b_ref, q_geom_ref, t_pack_ref, c_ref,
                         *, w_bbox, w_giou):
    # ---- fused class costs: one MXU pass (weights/bias folded into B) -------
    c = jnp.dot(a_ref[...], b_ref[...], preferred_element_type=jnp.float32)

    tg = t_pack_ref[...]                       # (24, TILE_T)
    c = c + tg[19:20, :]                       # verb-class bias row
    any_m = tg[18:19, :]                       # (1, TILE_T)
    all_zero = 1.0 - any_m

    qg = q_geom_ref[...]                       # (TILE_NQ, 18)

    def pairwise(qoff, toff):
        q = tuple(qg[:, qoff + k:qoff + k + 1] for k in range(9))
        t = tuple(tg[toff + k:toff + k + 1, :] for k in range(9))
        (q_cx, q_cy, q_w, q_h, qx1, qy1, qx2, qy2, q_area) = q
        (t_cx, t_cy, t_w, t_h, tx1, ty1, tx2, ty2, t_area) = t
        l1 = (jnp.abs(q_cx - t_cx) + jnp.abs(q_cy - t_cy)
              + jnp.abs(q_w - t_w) + jnp.abs(q_h - t_h))
        iw = jnp.maximum(jnp.minimum(qx2, tx2) - jnp.maximum(qx1, tx1), 0.0)
        ih = jnp.maximum(jnp.minimum(qy2, ty2) - jnp.maximum(qy1, ty1), 0.0)
        inter = iw * ih
        union = q_area + t_area - inter
        cw = jnp.maximum(qx2, tx2) - jnp.minimum(qx1, tx1)
        ch = jnp.maximum(qy2, ty2) - jnp.minimum(qy1, ty1)
        carea = jnp.maximum(cw, 0.0) * jnp.maximum(ch, 0.0)
        # single-divide GIoU: inter/union - (carea-union)/carea
        giou = (inter * carea - (carea - union) * union) / (union * carea)
        return l1, giou

    sub_l1, sub_giou = pairwise(0, 0)
    obj_l1, obj_giou = pairwise(9, 9)

    # bbox cost accumulated immediately (keeps fewer full-tile temps alive)
    c = c + w_bbox * jnp.maximum(sub_l1, obj_l1 * any_m)

    cost_sub_giou = -sub_giou
    cost_obj_giou = -obj_giou + cost_sub_giou * all_zero
    c = c + w_giou * jnp.maximum(cost_sub_giou, cost_obj_giou)

    c_ref[...] = c.astype(c_ref.dtype)


# ------------------------------ wrapper --------------------------------------

def _box_geom9(boxes_cxcywh):
    """(N,4) cxcywh -> (N,9): [cx,cy,w,h, x1,y1,x2,y2, area]."""
    cx, cy, w, h = (boxes_cxcywh[:, k] for k in range(4))
    x1 = cx - 0.5 * w
    y1 = cy - 0.5 * h
    x2 = cx + 0.5 * w
    y2 = cy + 0.5 * h
    area = (x2 - x1) * (y2 - y1)
    return jnp.stack([cx, cy, w, h, x1, y1, x2, y2, area], axis=-1)


def _pad_rows_with_dummy_box(boxes, n_rows):
    boxes = boxes.astype(jnp.float32)
    pad = n_rows - boxes.shape[0]
    dummy = jnp.broadcast_to(jnp.array([0.5, 0.5, 0.5, 0.5], jnp.float32), (pad, 4))
    return jnp.concatenate([boxes, dummy], axis=0)


def _vmem_limit_bytes():
    try:
        info = pltpu.get_tpu_info()
        cap = getattr(info, "vmem_capacity_bytes", None)
        if cap:
            # leave headroom; v7x physical is 64 MiB, v5e/v6e 128 MiB
            return int(min(96 * 2**20, (cap * 3) // 4))
    except Exception:
        pass
    return 48 * 2**20


def matcher_cost_pallas(obj_logits, verb_logits, sub_boxes, obj_boxes,
                        tgt_obj_labels, tgt_verb_labels, tgt_sub_boxes, tgt_obj_boxes,
                        *, w_obj_class=1.0, w_verb_class=1.0, w_bbox=1.0, w_giou=1.0,
                        tile_nq=512, tile_t=1024):
    """Returns C of shape (NQ, T) = (bs*num_queries, total num targets)."""
    f32 = jnp.float32
    NQ, Cobj = obj_logits.shape
    Cverb = verb_logits.shape[1]
    T = int(tgt_obj_labels.shape[0])

    Cobj_p = _round_up(Cobj, 128)
    Cverb_p = _round_up(Cverb, 128)
    K = Cobj_p + Cverb_p

    # ---- tile selection ------------------------------------------------------
    NQ8 = _round_up(NQ, 8)
    tile_nq = min(tile_nq, NQ8)
    if NQ8 // tile_nq < 2 and NQ8 >= 16:
        # guarantee >=2 NQ tiles so both v7x TensorCores get work
        tile_nq = max(8, _round_up(NQ8 // 2, 8))
    NQ_p = _round_up(NQ8, tile_nq)

    T128 = _round_up(max(T, 1), 128)
    tile_t = min(tile_t, T128)
    T_p = _round_up(T128, tile_t)

    # ---- query side: softmax/sigmoid hoisted out of the kernel --------------
    prob = jax.nn.softmax(obj_logits.astype(f32), axis=-1)               # (NQ, Cobj)
    vp = jax.nn.sigmoid(verb_logits.astype(f32))                         # (NQ, Cverb)
    a_mat = jnp.zeros((NQ_p, K), f32)
    a_mat = a_mat.at[:NQ, :Cobj].set(prob)
    a_mat = a_mat.at[:NQ, Cobj_p:Cobj_p + Cverb].set(vp)

    q_geom = jnp.concatenate(
        [_box_geom9(_pad_rows_with_dummy_box(sub_boxes, NQ_p)),
         _box_geom9(_pad_rows_with_dummy_box(obj_boxes, NQ_p))], axis=1)  # (NQ_p, 18)

    # ---- target side: fused matmul operand B + verb bias row ----------------
    tv = tgt_verb_labels.astype(f32).T                                    # (Cverb, T)
    pos = tv / (jnp.sum(tv, axis=0, keepdims=True) + 1e-4)
    neg = (1.0 - tv) / (jnp.sum(1.0 - tv, axis=0, keepdims=True) + 1e-4)
    onehot = jax.nn.one_hot(tgt_obj_labels.astype(jnp.int32), Cobj, dtype=f32).T  # (Cobj, T)
    b_mat = jnp.zeros((K, T_p), f32)
    b_mat = b_mat.at[:Cobj, :T].set((-float(w_obj_class)) * onehot)
    b_mat = b_mat.at[Cobj_p:Cobj_p + Cverb, :T].set(
        (-0.5 * float(w_verb_class)) * (pos - neg))
    verb_bias = (-0.5 * float(w_verb_class)) * jnp.sum(neg, axis=0)      # (T,)

    # packed target block: rows 0-8 sub geom, 9-17 obj geom, 18 any-mask, 19 bias
    t_sub_g = _box_geom9(_pad_rows_with_dummy_box(tgt_sub_boxes, T_p)).T  # (9, T_p)
    t_obj_g = _box_geom9(_pad_rows_with_dummy_box(tgt_obj_boxes, T_p)).T
    any_mask = jnp.any(tgt_obj_boxes != 0, axis=1).astype(f32)
    any_row = jnp.pad(any_mask, (0, T_p - T), constant_values=1.0).reshape(1, T_p)
    bias_row = jnp.pad(verb_bias, (0, T_p - T)).reshape(1, T_p)
    t_pack = jnp.concatenate(
        [t_sub_g, t_obj_g, any_row, bias_row, jnp.zeros((4, T_p), f32)], axis=0)  # (24, T_p)

    kernel = functools.partial(_matcher_cost_kernel,
                               w_bbox=float(w_bbox), w_giou=float(w_giou))

    n_i = NQ_p // tile_nq
    n_j = T_p // tile_t
    # NQ innermost: j-indexed blocks (B, t_pack) stay VMEM-resident across the
    # inner loop; only the smaller i-indexed A / q_geom blocks stream per step.
    grid = (n_j, n_i)

    flops = 2 * NQ_p * K * T_p + 80 * NQ_p * T_p
    bytes_accessed = 4 * (NQ_p * K + K * T_p + NQ_p * 18 + 24 * T_p + NQ_p * T_p)
    cost = pl.CostEstimate(flops=int(flops), transcendentals=0,
                           bytes_accessed=int(bytes_accessed))

    c_pad = pl.pallas_call(
        kernel,
        grid=grid,
        in_specs=[
            pl.BlockSpec((tile_nq, K), lambda j, i: (i, 0)),        # A = [prob | vp]
            pl.BlockSpec((K, tile_t), lambda j, i: (0, j)),         # fused B
            pl.BlockSpec((tile_nq, 18), lambda j, i: (i, 0)),       # query geom
            pl.BlockSpec((24, tile_t), lambda j, i: (0, j)),        # target pack
        ],
        out_specs=pl.BlockSpec((tile_nq, tile_t), lambda j, i: (i, j)),
        out_shape=jax.ShapeDtypeStruct((NQ_p, T_p), jnp.float32),
        compiler_params=pltpu.CompilerParams(
            dimension_semantics=("parallel", "parallel"),
            vmem_limit_bytes=_vmem_limit_bytes()),
        cost_estimate=cost,
    )(a_mat, b_mat, q_geom, t_pack)

    return c_pad[:NQ, :T]


# ----------------------------- JAX reference ---------------------------------

def _cxcywh_to_xyxy(b):
    cx, cy, w, h = b[..., 0], b[..., 1], b[..., 2], b[..., 3]
    return jnp.stack([cx - 0.5 * w, cy - 0.5 * h, cx + 0.5 * w, cy + 0.5 * h], axis=-1)


def _giou_ref(a_xyxy, b_xyxy):
    area_a = (a_xyxy[:, 2] - a_xyxy[:, 0]) * (a_xyxy[:, 3] - a_xyxy[:, 1])
    area_b = (b_xyxy[:, 2] - b_xyxy[:, 0]) * (b_xyxy[:, 3] - b_xyxy[:, 1])
    lt = jnp.maximum(a_xyxy[:, None, :2], b_xyxy[None, :, :2])
    rb = jnp.minimum(a_xyxy[:, None, 2:], b_xyxy[None, :, 2:])
    wh = jnp.clip(rb - lt, 0.0)
    inter = wh[..., 0] * wh[..., 1]
    union = area_a[:, None] + area_b[None, :] - inter
    iou = inter / union
    lt_c = jnp.minimum(a_xyxy[:, None, :2], b_xyxy[None, :, :2])
    rb_c = jnp.maximum(a_xyxy[:, None, 2:], b_xyxy[None, :, 2:])
    wh_c = jnp.clip(rb_c - lt_c, 0.0)
    carea = wh_c[..., 0] * wh_c[..., 1]
    return iou - (carea - union) / carea


def matcher_cost_reference(obj_logits, verb_logits, sub_boxes, obj_boxes,
                           tgt_obj_labels, tgt_verb_labels, tgt_sub_boxes, tgt_obj_boxes,
                           *, w_obj_class=1.0, w_verb_class=1.0, w_bbox=1.0, w_giou=1.0):
    out_obj_prob = jax.nn.softmax(obj_logits, axis=-1)
    out_verb_prob = jax.nn.sigmoid(verb_logits)
    cost_obj_class = -out_obj_prob[:, tgt_obj_labels]
    tv = tgt_verb_labels.T
    cost_verb_class = -(out_verb_prob @ tv / (tv.sum(0, keepdims=True) + 1e-4)
                        + (1 - out_verb_prob) @ (1 - tv) / ((1 - tv).sum(0, keepdims=True) + 1e-4)) / 2
    cost_sub_bbox = jnp.sum(jnp.abs(sub_boxes[:, None, :] - tgt_sub_boxes[None, :, :]), -1)
    any_mask = jnp.any(tgt_obj_boxes != 0, axis=1).astype(jnp.float32)
    cost_obj_bbox = jnp.sum(jnp.abs(obj_boxes[:, None, :] - tgt_obj_boxes[None, :, :]), -1) * any_mask[None, :]
    cost_bbox = jnp.maximum(cost_sub_bbox, cost_obj_bbox)
    cost_sub_giou = -_giou_ref(_cxcywh_to_xyxy(sub_boxes), _cxcywh_to_xyxy(tgt_sub_boxes))
    all_zero = jnp.all(tgt_obj_boxes == 0, axis=1).astype(jnp.float32)
    cost_obj_giou = -_giou_ref(_cxcywh_to_xyxy(obj_boxes), _cxcywh_to_xyxy(tgt_obj_boxes)) \
        + cost_sub_giou * all_zero[None, :]
    cost_giou = jnp.maximum(cost_sub_giou, cost_obj_giou)
    return (w_obj_class * cost_obj_class + w_verb_class * cost_verb_class
            + w_bbox * cost_bbox + w_giou * cost_giou)


# ---------------------- host-side Hungarian assignment -----------------------

try:
    from scipy.optimize import linear_sum_assignment
except Exception:  # pragma: no cover
    # TODO(synk): exact Hungarian assignment has no Pallas/JAX equivalent; greedy fallback.
    def linear_sum_assignment(cost):
        cost = np.asarray(cost, dtype=np.float64).copy()
        rows, cols = [], []
        for _ in range(min(cost.shape)):
            r, c = np.unravel_index(np.argmin(cost), cost.shape)
            rows.append(r); cols.append(c)
            cost[r, :] = np.inf; cost[:, c] = np.inf
        order = np.argsort(rows)
        return np.array(rows)[order], np.array(cols)[order]


# ---------------------------------- main -------------------------------------

if __name__ == "__main__":
    # Small synthetic problem consistent with the module's forward.
    bs, num_queries = 2, 8
    num_obj_classes, num_verb_classes = 32, 16
    sizes = [3, 3]                      # targets per image
    T = sum(sizes)
    NQ = bs * num_queries

    key = jax.random.PRNGKey(0)
    k = jax.random.split(key, 8)

    pred_obj_logits = jax.random.normal(k[0], (bs, num_queries, num_obj_classes), jnp.float32)
    pred_verb_logits = jax.random.normal(k[1], (bs, num_queries, num_verb_classes), jnp.float32)
    pred_sub_boxes = jax.random.uniform(k[2], (bs, num_queries, 4), jnp.float32, 0.1, 0.9)
    pred_obj_boxes = jax.random.uniform(k[3], (bs, num_queries, 4), jnp.float32, 0.1, 0.9)

    tgt_obj_labels = jax.random.randint(k[4], (T,), 0, num_obj_classes)
    tgt_verb_labels = (jax.random.uniform(k[5], (T, num_verb_classes)) > 0.7).astype(jnp.float32)
    tgt_sub_boxes = jax.random.uniform(k[6], (T, 4), jnp.float32, 0.1, 0.9)
    tgt_obj_boxes = jax.random.uniform(k[7], (T, 4), jnp.float32, 0.1, 0.9)
    # Exercise the "object box all zeros" masking path on one target.
    tgt_obj_boxes = tgt_obj_boxes.at[2].set(0.0)

    # Flatten predictions (matches outputs[...].flatten(0, 1) in the module).
    obj_logits = pred_obj_logits.reshape(NQ, num_obj_classes)
    verb_logits = pred_verb_logits.reshape(NQ, num_verb_classes)
    sub_boxes = pred_sub_boxes.reshape(NQ, 4)
    obj_boxes = pred_obj_boxes.reshape(NQ, 4)

    weights = dict(w_obj_class=1.0, w_verb_class=1.0, w_bbox=1.0, w_giou=1.0)

    C = matcher_cost_pallas(obj_logits, verb_logits, sub_boxes, obj_boxes,
                            tgt_obj_labels, tgt_verb_labels, tgt_sub_boxes, tgt_obj_boxes,
                            **weights)
    C = jax.block_until_ready(C)

    C_ref = matcher_cost_reference(obj_logits, verb_logits, sub_boxes, obj_boxes,
                                   tgt_obj_labels, tgt_verb_labels, tgt_sub_boxes, tgt_obj_boxes,
                                   **weights)
    C_ref = jax.block_until_ready(C_ref)

    np.testing.assert_allclose(np.asarray(C), np.asarray(C_ref), rtol=3e-5, atol=3e-5)

    # Per-image Hungarian assignment (host), matching C.view(bs, nq, -1).split(sizes, -1).
    C_np = np.asarray(C).reshape(bs, num_queries, T)
    indices, off = [], 0
    for i, sz in enumerate(sizes):
        ri, ci = linear_sum_assignment(C_np[i][:, off:off + sz])
        indices.append((np.asarray(ri, np.int64), np.asarray(ci, np.int64)))
        off += sz

    # TODO(synk): subject_class=True branch (pad_sequence of ragged verb labels +
    # subject class cost) is ragged/host-side bookkeeping and is not implemented here.

    assert len(indices) == bs
    print("KERNEL_OK")
</pallas_src>

<mosaic_0001>
module attributes {stable_mosaic.version = 11 : i64} {
  func.func @_matcher_cost_kernel(%arg0: i32, %arg1: i32, %arg2: memref<8x256xf32, #tpu.memory_space<vmem>>, %arg3: memref<256x128xf32, #tpu.memory_space<vmem>>, %arg4: memref<8x18xf32, #tpu.memory_space<vmem>>, %arg5: memref<24x128xf32, #tpu.memory_space<vmem>>, %arg6: memref<8x128xf32, #tpu.memory_space<vmem>>) attributes {dimension_semantics = [#tpu.dimension_semantics<parallel>, #tpu.dimension_semantics<parallel>], iteration_bounds = array<i64: 1, 2>, scalar_prefetch = 0 : i64, scratch_operands = 0 : i64, tpu.core_type = #tpu.core_type<tc>, window_params = [{transform_indices = @transform_0, window_bounds = array<i64: 8, 256>}, {transform_indices = @transform_1, window_bounds = array<i64: 256, 128>}, {transform_indices = @transform_2, window_bounds = array<i64: 8, 18>}, {transform_indices = @transform_3, window_bounds = array<i64: 24, 128>}, {transform_indices = @transform_4, window_bounds = array<i64: 8, 128>}]} {
    %c0 = arith.constant 0 : index
    %c0_0 = arith.constant 0 : index
    %0 = vector.load %arg2[%c0, %c0_0] : memref<8x256xf32, #tpu.memory_space<vmem>>, vector<8x256xf32>
    %c0_1 = arith.constant 0 : index
    %c0_2 = arith.constant 0 : index
    %1 = vector.load %arg3[%c0_1, %c0_2] : memref<256x128xf32, #tpu.memory_space<vmem>>, vector<256x128xf32>
    %cst = arith.constant dense<0.000000e+00> : vector<8x128xf32>
    %2 = tpu.matmul %0, %1, %cst {dimension_numbers = #tpu.dot_dimension_numbers<[1], [0], [0], [1], [0, 0, 1, 1], [], []>} : vector<8x256xf32>, vector<256x128xf32>, vector<8x128xf32> -> vector<8x128xf32>
    %c0_3 = arith.constant 0 : index
    %c0_4 = arith.constant 0 : index
    %3 = vector.load %arg5[%c0_3, %c0_4] : memref<24x128xf32, #tpu.memory_space<vmem>>, vector<24x128xf32>
    %4 = vector.extract_strided_slice %3 {offsets = [19, 0], sizes = [1, 128], strides = [1, 1]} : vector<24x128xf32> to vector<1x128xf32>
    %5 = vector.broadcast %4 : vector<1x128xf32> to vector<8x128xf32>
    %6 = arith.addf %2, %5 : vector<8x128xf32>
    %7 = vector.extract_strided_slice %3 {offsets = [18, 0], sizes = [1, 128], strides = [1, 1]} : vector<24x128xf32> to vector<1x128xf32>
    %cst_5 = arith.constant 1.000000e+00 : f32
    %8 = vector.broadcast %cst_5 : f32 to vector<1x128xf32>
    %9 = arith.subf %8, %7 : vector<1x128xf32>
    %c0_6 = arith.constant 0 : index
    %c0_7 = arith.constant 0 : index
    %10 = vector.load %arg4[%c0_6, %c0_7] : memref<8x18xf32, #tpu.memory_space<vmem>>, vector<8x18xf32>
    %11 = vector.extract_strided_slice %10 {offsets = [0, 0], sizes = [8, 1], strides = [1, 1]} : vector<8x18xf32> to vector<8x1xf32>
    %12 = vector.extract_strided_slice %10 {offsets = [0, 1], sizes = [8, 1], strides = [1, 1]} : vector<8x18xf32> to vector<8x1xf32>
    %13 = vector.extract_strided_slice %10 {offsets = [0, 2], sizes = [8, 1], strides = [1, 1]} : vector<8x18xf32> to vector<8x1xf32>
    %14 = vector.extract_strided_slice %10 {offsets = [0, 3], sizes = [8, 1], strides = [1, 1]} : vector<8x18xf32> to vector<8x1xf32>
    %15 = vector.extract_strided_slice %10 {offsets = [0, 4], sizes = [8, 1], strides = [1, 1]} : vector<8x18xf32> to vector<8x1xf32>
    %16 = vector.extract_strided_slice %10 {offsets = [0, 5], sizes = [8, 1], strides = [1, 1]} : vector<8x18xf32> to vector<8x1xf32>
    %17 = vector.extract_strided_slice %10 {offsets = [0, 6], sizes = [8, 1], strides = [1, 1]} : vector<8x18xf32> to vector<8x1xf32>
    %18 = vector.extract_strided_slice %10 {offsets = [0, 7], sizes = [8, 1], strides = [1, 1]} : vector<8x18xf32> to vector<8x1xf32>
    %19 = vector.extract_strided_slice %10 {offsets = [0, 8], sizes = [8, 1], strides = [1, 1]} : vector<8x18xf32> to vector<8x1xf32>
    %20 = vector.extract_strided_slice %3 {offsets = [0, 0], sizes = [1, 128], strides = [1, 1]} : vector<24x128xf32> to vector<1x128xf32>
    %21 = vector.extract_strided_slice %3 {offsets = [1, 0], sizes = [1, 128], strides = [1, 1]} : vector<24x128xf32> to vector<1x128xf32>
    %22 = vector.extract_strided_slice %3 {offsets = [2, 0], sizes = [1, 128], strides = [1, 1]} : vector<24x128xf32> to vector<1x128xf32>
    %23 = vector.extract_strided_slice %3 {offsets = [3, 0], sizes = [1, 128], strides = [1, 1]} : vector<24x128xf32> to vector<1x128xf32>
    %24 = vector.extract_strided_slice %3 {offsets = [4, 0], sizes = [1, 128], strides = [1, 1]} : vector<24x128xf32> to vector<1x128xf32>
    %25 = vector.extract_strided_slice %3 {offsets = [5, 0], sizes = [1, 128], strides = [1, 1]} : vector<24x128xf32> to vector<1x128xf32>
    %26 = vector.extract_strided_slice %3 {offsets = [6, 0], sizes = [1, 128], strides = [1, 1]} : vector<24x128xf32> to vector<1x128xf32>
    %27 = vector.extract_strided_slice %3 {offsets = [7, 0], sizes = [1, 128], strides = [1, 1]} : vector<24x128xf32> to vector<1x128xf32>
    %28 = vector.extract_strided_slice %3 {offsets = [8, 0], sizes = [1, 128], strides = [1, 1]} : vector<24x128xf32> to vector<1x128xf32>
    %29 = vector.broadcast %11 : vector<8x1xf32> to vector<8x128xf32>
    %30 = vector.broadcast %20 : vector<1x128xf32> to vector<8x128xf32>
    %31 = arith.subf %29, %30 : vector<8x128xf32>
    %32 = math.absf %31 : vector<8x128xf32>
    %33 = vector.broadcast %12 : vector<8x1xf32> to vector<8x128xf32>
    %34 = vector.broadcast %21 : vector<1x128xf32> to vector<8x128xf32>
    %35 = arith.subf %33, %34 : vector<8x128xf32>
    %36 = math.absf %35 : vector<8x128xf32>
    %37 = arith.addf %32, %36 : vector<8x128xf32>
    %38 = vector.broadcast %13 : vector<8x1xf32> to vector<8x128xf32>
    %39 = vector.broadcast %22 : vector<1x128xf32> to vector<8x128xf32>
    %40 = arith.subf %38, %39 : vector<8x128xf32>
    %41 = math.absf %40 : vector<8x128xf32>
    %42 = arith.addf %37, %41 : vector<8x128xf32>
    %43 = vector.broadcast %14 : vector<8x1xf32> to vector<8x128xf32>
    %44 = vector.broadcast %23 : vector<1x128xf32> to vector<8x128xf32>
    %45 = arith.subf %43, %44 : vector<8x128xf32>
    %46 = math.absf %45 : vector<8x128xf32>
    %47 = arith.addf %42, %46 : vector<8x128xf32>
    %48 = vector.broadcast %17 : vector<8x1xf32> to vector<8x128xf32>
    %49 = vector.broadcast %26 : vector<1x128xf32> to vector<8x128xf32>
    %50 = arith.minimumf %48, %49 : vector<8x128xf32>
    %51 = vector.broadcast %15 : vector<8x1xf32> to vector<8x128xf32>
    %52 = vector.broadcast %24 : vector<1x128xf32> to vector<8x128xf32>
    %53 = arith.maximumf %51, %52 : vector<8x128xf32>
    %54 = arith.subf %50, %53 : vector<8x128xf32>
    %cst_8 = arith.constant 0.000000e+00 : f32
    %55 = vector.broadcast %cst_8 : f32 to vector<8x128xf32>
    %56 = arith.maximumf %54, %55 : vector<8x128xf32>
    %57 = vector.broadcast %18 : vector<8x1xf32> to vector<8x128xf32>
    %58 = vector.broadcast %27 : vector<1x128xf32> to vector<8x128xf32>
    %59 = arith.minimumf %57, %58 : vector<8x128xf32>
    %60 = vector.broadcast %16 : vector<8x1xf32> to vector<8x128xf32>
    %61 = vector.broadcast %25 : vector<1x128xf32> to vector<8x128xf32>
    %62 = arith.maximumf %60, %61 : vector<8x128xf32>
    %63 = arith.subf %59, %62 : vector<8x128xf32>
    %cst_9 = arith.constant 0.000000e+00 : f32
    %64 = vector.broadcast %cst_9 : f32 to vector<8x128xf32>
    %65 = arith.maximumf %63, %64 : vector<8x128xf32>
    %66 = arith.mulf %56, %65 : vector<8x128xf32>
    %67 = vector.broadcast %19 : vector<8x1xf32> to vector<8x128xf32>
    %68 = vector.broadcast %28 : vector<1x128xf32> to vector<8x128xf32>
    %69 = arith.addf %67, %68 : vector<8x128xf32>
    %70 = arith.subf %69, %66 : vector<8x128xf32>
    %71 = vector.broadcast %17 : vector<8x1xf32> to vector<8x128xf32>
    %72 = vector.broadcast %26 : vector<1x128xf32> to vector<8x128xf32>
    %73 = arith.maximumf %71, %72 : vector<8x128xf32>
    %74 = vector.broadcast %15 : vector<8x1xf32> to vector<8x128xf32>
    %75 = vector.broadcast %24 : vector<1x128xf32> to vector<8x128xf32>
    %76 = arith.minimumf %74, %75 : vector<8x128xf32>
    %77 = arith.subf %73, %76 : vector<8x128xf32>
    %78 = vector.broadcast %18 : vector<8x1xf32> to vector<8x128xf32>
    %79 = vector.broadcast %27 : vector<1x128xf32> to vector<8x128xf32>
    %80 = arith.maximumf %78, %79 : vector<8x128xf32>
    %81 = vector.broadcast %16 : vector<8x1xf32> to vector<8x128xf32>
    %82 = vector.broadcast %25 : vector<1x128xf32> to vector<8x128xf32>
    %83 = arith.minimumf %81, %82 : vector<8x128xf32>
    %84 = arith.subf %80, %83 : vector<8x128xf32>
    %cst_10 = arith.constant 0.000000e+00 : f32
    %85 = vector.broadcast %cst_10 : f32 to vector<8x128xf32>
    %86 = arith.maximumf %77, %85 : vector<8x128xf32>
    %cst_11 = arith.constant 0.000000e+00 : f32
    %87 = vector.broadcast %cst_11 : f32 to vector<8x128xf32>
    %88 = arith.maximumf %84, %87 : vector<8x128xf32>
    %89 = arith.mulf %86, %88 : vector<8x128xf32>
    %90 = arith.mulf %66, %89 : vector<8x128xf32>
    %91 = arith.subf %89, %70 : vector<8x128xf32>
    %92 = arith.mulf %91, %70 : vector<8x128xf32>
    %93 = arith.subf %90, %92 : vector<8x128xf32>
    %94 = arith.mulf %70, %89 : vector<8x128xf32>
    %95 = arith.divf %93, %94 : vector<8x128xf32>
    %96 = vector.extract_strided_slice %10 {offsets = [0, 9], sizes = [8, 1], strides = [1, 1]} : vector<8x18xf32> to vector<8x1xf32>
    %97 = vector.extract_strided_slice %10 {offsets = [0, 10], sizes = [8, 1], strides = [1, 1]} : vector<8x18xf32> to vector<8x1xf32>
    %98 = vector.extract_strided_slice %10 {offsets = [0, 11], sizes = [8, 1], strides = [1, 1]} : vector<8x18xf32> to vector<8x1xf32>
    %99 = vector.extract_strided_slice %10 {offsets = [0, 12], sizes = [8, 1], strides = [1, 1]} : vector<8x18xf32> to vector<8x1xf32>
    %100 = vector.extract_strided_slice %10 {offsets = [0, 13], sizes = [8, 1], strides = [1, 1]} : vector<8x18xf32> to vector<8x1xf32>
    %101 = vector.extract_strided_slice %10 {offsets = [0, 14], sizes = [8, 1], strides = [1, 1]} : vector<8x18xf32> to vector<8x1xf32>
    %102 = vector.extract_strided_slice %10 {offsets = [0, 15], sizes = [8, 1], strides = [1, 1]} : vector<8x18xf32> to vector<8x1xf32>
    %103 = vector.extract_strided_slice %10 {offsets = [0, 16], sizes = [8, 1], strides = [1, 1]} : vector<8x18xf32> to vector<8x1xf32>
    %104 = vector.extract_strided_slice %10 {offsets = [0, 17], sizes = [8, 1], strides = [1, 1]} : vector<8x18xf32> to vector<8x1xf32>
    %105 = vector.extract_strided_slice %3 {offsets = [9, 0], sizes = [1, 128], strides = [1, 1]} : vector<24x128xf32> to vector<1x128xf32>
    %106 = vector.extract_strided_slice %3 {offsets = [10, 0], sizes = [1, 128], strides = [1, 1]} : vector<24x128xf32> to vector<1x128xf32>
    %107 = vector.extract_strided_slice %3 {offsets = [11, 0], sizes = [1, 128], strides = [1, 1]} : vector<24x128xf32> to vector<1x128xf32>
    %108 = vector.extract_strided_slice %3 {offsets = [12, 0], sizes = [1, 128], strides = [1, 1]} : vector<24x128xf32> to vector<1x128xf32>
    %109 = vector.extract_strided_slice %3 {offsets = [13, 0], sizes = [1, 128], strides = [1, 1]} : vector<24x128xf32> to vector<1x128xf32>
    %110 = vector.extract_strided_slice %3 {offsets = [14, 0], sizes = [1, 128], strides = [1, 1]} : vector<24x128xf32> to vector<1x128xf32>
    %111 = vector.extract_strided_slice %3 {offsets = [15, 0], sizes = [1, 128], strides = [1, 1]} : vector<24x128xf32> to vector<1x128xf32>
    %112 = vector.extract_strided_slice %3 {offsets = [16, 0], sizes = [1, 128], strides = [1, 1]} : vector<24x128xf32> to vector<1x128xf32>
    %113 = vector.extract_strided_slice %3 {offsets = [17, 0], sizes = [1, 128], strides = [1, 1]} : vector<24x128xf32> to vector<1x128xf32>
    %114 = vector.broadcast %96 : vector<8x1xf32> to vector<8x128xf32>
    %115 = vector.broadcast %105 : vector<1x128xf32> to vector<8x128xf32>
    %116 = arith.subf %114, %115 : vector<8x128xf32>
    %117 = math.absf %116 : vector<8x128xf32>
    %118 = vector.broadcast %97 : vector<8x1xf32> to vector<8x128xf32>
    %119 = vector.broadcast %106 : vector<1x128xf32> to vector<8x128xf32>
    %120 = arith.subf %118, %119 : vector<8x128xf32>
    %121 = math.absf %120 : vector<8x128xf32>
    %122 = arith.addf %117, %121 : vector<8x128xf32>
    %123 = vector.broadcast %98 : vector<8x1xf32> to vector<8x128xf32>
    %124 = vector.broadcast %107 : vector<1x128xf32> to vector<8x128xf32>
    %125 = arith.subf %123, %124 : vector<8x128xf32>
    %126 = math.absf %125 : vector<8x128xf32>
    %127 = arith.addf %122, %126 : vector<8x128xf32>
    %128 = vector.broadcast %99 : vector<8x1xf32> to vector<8x128xf32>
    %129 = vector.broadcast %108 : vector<1x128xf32> to vector<8x128xf32>
    %130 = arith.subf %128, %129 : vector<8x128xf32>
    %131 = math.absf %130 : vector<8x128xf32>
    %132 = arith.addf %127, %131 : vector<8x128xf32>
    %133 = vector.broadcast %102 : vector<8x1xf32> to vector<8x128xf32>
    %134 = vector.broadcast %111 : vector<1x128xf32> to vector<8x128xf32>
    %135 = arith.minimumf %133, %134 : vector<8x128xf32>
    %136 = vector.broadcast %100 : vector<8x1xf32> to vector<8x128xf32>
    %137 = vector.broadcast %109 : vector<1x128xf32> to vector<8x128xf32>
    %138 = arith.maximumf %136, %137 : vector<8x128xf32>
    %139 = arith.subf %135, %138 : vector<8x128xf32>
    %cst_12 = arith.constant 0.000000e+00 : f32
    %140 = vector.broadcast %cst_12 : f32 to vector<8x128xf32>
    %141 = arith.maximumf %139, %140 : vector<8x128xf32>
    %142 = vector.broadcast %103 : vector<8x1xf32> to vector<8x128xf32>
    %143 = vector.broadcast %112 : vector<1x128xf32> to vector<8x128xf32>
    %144 = arith.minimumf %142, %143 : vector<8x128xf32>
    %145 = vector.broadcast %101 : vector<8x1xf32> to vector<8x128xf32>
    %146 = vector.broadcast %110 : vector<1x128xf32> to vector<8x128xf32>
    %147 = arith.maximumf %145, %146 : vector<8x128xf32>
    %148 = arith.subf %144, %147 : vector<8x128xf32>
    %cst_13 = arith.constant 0.000000e+00 : f32
    %149 = vector.broadcast %cst_13 : f32 to vector<8x128xf32>
    %150 = arith.maximumf %148, %149 : vector<8x128xf32>
    %151 = arith.mulf %141, %150 : vector<8x128xf32>
    %152 = vector.broadcast %104 : vector<8x1xf32> to vector<8x128xf32>
    %153 = vector.broadcast %113 : vector<1x128xf32> to vector<8x128xf32>
    %154 = arith.addf %152, %153 : vector<8x128xf32>
    %155 = arith.subf %154, %151 : vector<8x128xf32>
    %156 = vector.broadcast %102 : vector<8x1xf32> to vector<8x128xf32>
    %157 = vector.broadcast %111 : vector<1x128xf32> to vector<8x128xf32>
    %158 = arith.maximumf %156, %157 : vector<8x128xf32>
    %159 = vector.broadcast %100 : vector<8x1xf32> to vector<8x128xf32>
    %160 = vector.broadcast %109 : vector<1x128xf32> to vector<8x128xf32>
    %161 = arith.minimumf %159, %160 : vector<8x128xf32>
    %162 = arith.subf %158, %161 : vector<8x128xf32>
    %163 = vector.broadcast %103 : vector<8x1xf32> to vector<8x128xf32>
    %164 = vector.broadcast %112 : vector<1x128xf32> to vector<8x128xf32>
    %165 = arith.maximumf %163, %164 : vector<8x128xf32>
    %166 = vector.broadcast %101 : vector<8x1xf32> to vector<8x128xf32>
    %167 = vector.broadcast %110 : vector<1x128xf32> to vector<8x128xf32>
    %168 = arith.minimumf %166, %167 : vector<8x128xf32>
    %169 = arith.subf %165, %168 : vector<8x128xf32>
    %cst_14 = arith.constant 0.000000e+00 : f32
    %170 = vector.broadcast %cst_14 : f32 to vector<8x128xf32>
    %171 = arith.maximumf %162, %170 : vector<8x128xf32>
    %cst_15 = arith.constant 0.000000e+00 : f32
    %172 = vector.broadcast %cst_15 : f32 to vector<8x128xf32>
    %173 = arith.maximumf %169, %172 : vector<8x128xf32>
    %174 = arith.mulf %171, %173 : vector<8x128xf32>
    %175 = arith.mulf %151, %174 : vector<8x128xf32>
    %176 = arith.subf %174, %155 : vector<8x128xf32>
    %177 = arith.mulf %176, %155 : vector<8x128xf32>
    %178 = arith.subf %175, %177 : vector<8x128xf32>
    %179 = arith.mulf %155, %174 : vector<8x128xf32>
    %180 = arith.divf %178, %179 : vector<8x128xf32>
    %181 = vector.broadcast %7 : vector<1x128xf32> to vector<8x128xf32>
    %182 = arith.mulf %132, %181 : vector<8x128xf32>
    %183 = arith.maximumf %47, %182 : vector<8x128xf32>
    %cst_16 = arith.constant 1.000000e+00 : f32
    %184 = vector.broadcast %cst_16 : f32 to vector<8x128xf32>
    %185 = arith.mulf %184, %183 : vector<8x128xf32>
    %186 = arith.addf %6, %185 : vector<8x128xf32>
    %cst_17 = arith.constant 0.000000e+00 : f32
    %187 = vector.broadcast %cst_17 : f32 to vector<8x128xf32>
    %188 = arith.subf %187, %95 : vector<8x128xf32>
    %cst_18 = arith.constant 0.000000e+00 : f32
    %189 = vector.broadcast %cst_18 : f32 to vector<8x128xf32>
    %190 = arith.subf %189, %180 : vector<8x128xf32>
    %191 = vector.broadcast %9 : vector<1x128xf32> to vector<8x128xf32>
    %192 = arith.mulf %188, %191 : vector<8x128xf32>
    %193 = arith.addf %190, %192 : vector<8x128xf32>
    %194 = arith.maximumf %188, %193 : vector<8x128xf32>
    %cst_19 = arith.constant 1.000000e+00 : f32
    %195 = vector.broadcast %cst_19 : f32 to vector<8x128xf32>
    %196 = arith.mulf %195, %194 : vector<8x128xf32>
    %197 = arith.addf %186, %196 : vector<8x128xf32>
    %c0_20 = arith.constant 0 : index
    %c0_21 = arith.constant 0 : index
    %198 = vector.load %arg6[%c0_20, %c0_21] : memref<8x128xf32, #tpu.memory_space<vmem>>, vector<8x128xf32>
    tpu.vector_store %arg6[%c0_20, %c0_21], %197 {strides = array<i32>} : memref<8x128xf32, #tpu.memory_space<vmem>>, vector<8x128xf32>,
    return
  }
  func.func @transform_0(%arg0: i32, %arg1: i32) -> (i32, i32) {
    %c0_i32 = arith.constant 0 : i32
    %c0_i32_0 = arith.constant 0 : i32
    return %arg1, %c0_i32 : i32, i32
  }
  func.func @transform_1(%arg0: i32, %arg1: i32) -> (i32, i32) {
    %c0_i32 = arith.constant 0 : i32
    %c0_i32_0 = arith.constant 0 : i32
    return %c0_i32, %arg0 : i32, i32
  }
  func.func @transform_2(%arg0: i32, %arg1: i32) -> (i32, i32) {
    %c0_i32 = arith.constant 0 : i32
    %c0_i32_0 = arith.constant 0 : i32
    return %arg1, %c0_i32 : i32, i32
  }
  func.func @transform_3(%arg0: i32, %arg1: i32) -> (i32, i32) {
    %c0_i32 = arith.constant 0 : i32
    %c0_i32_0 = arith.constant 0 : i32
    return %c0_i32, %arg0 : i32, i32
  }
  func.func @transform_4(%arg0: i32, %arg1: i32) -> (i32, i32) {
    %c0_i32 = arith.constant 0 : i32
    return %arg1, %arg0 : i32, i32
  }
}

</mosaic_0001>

<llo_original>
// kernel: tpu_custom_call.1
$region0: #{tpu_custom_call.1}
  #allocation0 [shape = 'u32[]', space=smem, size = 0x4, offset = 0x4, fixed_abs, tag = 'smem constant byte address 0x4 - core index']
  #allocation1 [shape = 'u32[144,128]{1,0:T(1,128)}', space=vmem, size = 0x12000, scoped, tag = 'internal scratch']
  %s0 = inlined_call_operand.hbm [shape: f32[16,256], index: 0, kind: input, shape index: {}]
  %s1 = inlined_call_operand.hbm [shape: f32[256,128], index: 1, kind: input, shape index: {}]
  %s2 = inlined_call_operand.hbm [shape: f32[16,18], index: 2, kind: input, shape index: {}]
  %s3 = inlined_call_operand.hbm [shape: f32[24,128], index: 3, kind: input, shape index: {}]
  %s4 = inlined_call_operand.hbm [shape: f32[16,128], index: 4, kind: output, shape index: {}]
  %s5 = sld [smem:[#allocation0]]
  $region65: #{tpu_custom_call.1} parent=0
    _
  %s7 = ssub.s32 1, %s5
  %s8 = scalar_select 0, %s7, %s5
  $region1: #{tpu_custom_call.1} parent=0
    #allocation2 [shape = 'u8[16384]{0}', space=vmem, size = 0x4000, scoped, tag = 'input window, operand 0']
    #allocation3 [shape = 's32[2]{0}', space=sflag, size = 0x8, scoped, tag = 'scoped memory for tpu_custom_call.1']
    #allocation4 [shape = 's32[2]{0}', space=sflag, size = 0x8, scoped, tag = 'scoped memory for tpu_custom_call.1']
    #allocation5 [shape = 'u8[131072]{0}', space=vmem, size = 0x20000, scoped, tag = 'input window, operand 1, single buffered']
    #allocation6 [shape = 's32[1]{0}', space=sflag, size = 0x4, scoped, tag = 'scoped memory for tpu_custom_call.1']
    #allocation7 [shape = 'u8[8192]{0}', space=vmem, size = 0x2000, scoped, tag = 'input window, operand 2']
    #allocation8 [shape = 'u8[12288]{0}', space=vmem, size = 0x3000, scoped, tag = 'input window, operand 3, single buffered']
    #allocation9 [shape = 'u8[8192]{0}', space=vmem, size = 0x2000, scoped, tag = 'output window, operand 0']
    %9 = vsyncpa [#allocation3], 0
    %s10 = scalar_lea.sflag [#allocation3], 1
    %11 = vsyncpa %s10, 0
    %12 = vsyncpa [#allocation6], 0
    %13 = vsyncpa [#allocation4], 0
    %s14 = scalar_lea.sflag [#allocation4], 1
    %15 = vsyncpa %s14, 0
    loop: start=0, step=1, limit=4
    $region2: #{tpu_custom_call.1} parent=1 // loop_pre_header
      _
    $region3: #{tpu_custom_call.1} parent=1 // loop_header
      %s17 = sphi 0, %s21
      %p18 = scmp.ge.s32.totalorder %s17, 4
      %s24 = sphi 0, %s36
      %s25 = sphi 0, %s32
      %s26 = sphi 0, %s24
      %s27 = sphi 0, %s25
      %s28 = sphi 0, %s26
      %s29 = sphi 0, %s27
      %s39 = sphi 0, %s41
      %s42 = sphi 0, %s39
      %s43 = sphi 0, %s42
      %s59 = sphi 0, %s43
      %s65 = sphi 0, %s67
      %s68 = sphi 0, %s65
      %s69 = sphi 0, %s68
      %s85 = sphi 0, %s69
      %s91 = sphi 0, %s93
      %s94 = sphi 0, %s91
      %s95 = sphi 0, %s94
      %s111 = sphi 0, %s95
      %s117 = sphi 0, %s119
      %s120 = sphi 0, %s117
      %s121 = sphi 0, %s120
      %s137 = sphi 0, %s121
      %s145 = sphi 0, %s147
      %s148 = sphi 0, %s145
      %s149 = sphi 0, %s148
      %s165 = sphi 0, %s149
    $region4: #{tpu_custom_call.1} parent=1 // loop_header_branch
      %20 = sbr.rel (%p18) target = $region8
    $region5: #{tpu_custom_call.1} parent=1 // loop_body
      %s22 = ssub.s32 %s17, 1
      %s23 = ssub.s32 %s17, 2
      %s30 = sadd.s32 1, %s25
      %p31 = scmp.ge.s32.totalorder %s30, 2
      %s32 = scalar_select %p31, 0, %s30
      %s33 = sadd.s32 1, %s24
      %s34 = scalar_select %p31, %s33, %s24
      %p35 = scmp.ge.s32.totalorder %s34, 1
      %s36 = scalar_select %p35, 0, %s34
      %s37 = ssub.s32 %s25, %s32
      %p38 = scmp.eq.s32.totalorder %s37, 0
      %s40 = sadd.s32 %s39, 1
      %s41 = scalar_select %p38, %s39, %s40
      %p44 = pneg %p38
      %p45 = scmp.eq.s32.totalorder %s17, 1
      %p46 = por %p44, %p45
      %p47 = scmp.ne.s32.totalorder %s39, %s42
      %p48 = scmp.eq.s32.totalorder %s17, 0
      %p49 = por %p47, %p48
      %p50 = scmp.ne.s32.totalorder %s39, %s42
      %p51 = scmp.eq.s32.totalorder %s22, 1
      %p52 = por %p50, %p51
      %p53 = scmp.ne.s32.totalorder %s42, %s43
      %p54 = scmp.eq.s32.totalorder %s22, 0
      %p55 = por %p53, %p54
      %p56 = scmp.ne.s32.totalorder %s42, %s43
      %p57 = scmp.eq.s32.totalorder %s23, 1
      %p58 = por %p56, %p57
      %p60 = scmp.ne.s32.totalorder %s43, %s59
      %p61 = scmp.eq.s32.totalorder %s23, 0
      %p62 = por %p60, %p61
      %s63 = ssub.s32 %s24, %s36
      %p64 = scmp.eq.s32.totalorder %s63, 0
      %s66 = sadd.s32 %s65, 1
      %s67 = scalar_select %p64, %s65, %s66
      %p70 = pneg %p64
      %p71 = scmp.eq.s32.totalorder %s17, 1
      %p72 = por %p70, %p71
      %p73 = scmp.ne.s32.totalorder %s65, %s68
      %p74 = scmp.eq.s32.totalorder %s17, 0
      %p75 = por %p73, %p74
      %p76 = scmp.ne.s32.totalorder %s65, %s68
      %p77 = scmp.eq.s32.totalorder %s22, 1
      %p78 = por %p76, %p77
      %p79 = scmp.ne.s32.totalorder %s68, %s69
      %p80 = scmp.eq.s32.totalorder %s22, 0
      %p81 = por %p79, %p80
      %p82 = scmp.ne.s32.totalorder %s68, %s69
      %p83 = scmp.eq.s32.totalorder %s23, 1
      %p84 = por %p82, %p83
      %p86 = scmp.ne.s32.totalorder %s69, %s85
      %p87 = scmp.eq.s32.totalorder %s23, 0
      %p88 = por %p86, %p87
      %s89 = ssub.s32 %s25, %s32
      %p90 = scmp.eq.s32.totalorder %s89, 0
      %s92 = sadd.s32 %s91, 1
      %s93 = scalar_select %p90, %s91, %s92
      %p96 = pneg %p90
      %p97 = scmp.eq.s32.totalorder %s17, 1
      %p98 = por %p96, %p97
      %p99 = scmp.ne.s32.totalorder %s91, %s94
      %p100 = scmp.eq.s32.totalorder %s17, 0
      %p101 = por %p99, %p100
      %p102 = scmp.ne.s32.totalorder %s91, %s94
      %p103 = scmp.eq.s32.totalorder %s22, 1
      %p104 = por %p102, %p103
      %p105 = scmp.ne.s32.totalorder %s94, %s95
      %p106 = scmp.eq.s32.totalorder %s22, 0
      %p107 = por %p105, %p106
      %p108 = scmp.ne.s32.totalorder %s94, %s95
      %p109 = scmp.eq.s32.totalorder %s23, 1
      %p110 = por %p108, %p109
      %p112 = scmp.ne.s32.totalorder %s95, %s111
      %p113 = scmp.eq.s32.totalorder %s23, 0
      %p114 = por %p112, %p113
      %s115 = ssub.s32 %s24, %s36
      %p116 = scmp.eq.s32.totalorder %s115, 0
      %s118 = sadd.s32 %s117, 1
      %s119 = scalar_select %p116, %s117, %s118
      %p122 = pneg %p116
      %p123 = scmp.eq.s32.totalorder %s17, 1
      %p124 = por %p122, %p123
      %p125 = scmp.ne.s32.totalorder %s117, %s120
      %p126 = scmp.eq.s32.totalorder %s17, 0
      %p127 = por %p125, %p126
      %p128 = scmp.ne.s32.totalorder %s117, %s120
      %p129 = scmp.eq.s32.totalorder %s22, 1
      %p130 = por %p128, %p129
      %p131 = scmp.ne.s32.totalorder %s120, %s121
      %p132 = scmp.eq.s32.totalorder %s22, 0
      %p133 = por %p131, %p132
      %p134 = scmp.ne.s32.totalorder %s120, %s121
      %p135 = scmp.eq.s32.totalorder %s23, 1
      %p136 = por %p134, %p135
      %p138 = scmp.ne.s32.totalorder %s121, %s137
      %p139 = scmp.eq.s32.totalorder %s23, 0
      %p140 = por %p138, %p139
      %s141 = ssub.s32 %s25, %s32
      %s142 = ssub.s32 %s24, %s36
      %s143 = sor.u32 %s141, %s142
      %p144 = scmp.eq.s32.totalorder %s143, 0
      %s146 = sadd.s32 %s145, 1
      %s147 = scalar_select %p144, %s145, %s146
      %p150 = pneg %p144
      %p151 = scmp.eq.s32.totalorder %s17, 1
      %p152 = por %p150, %p151
      %p153 = scmp.ne.s32.totalorder %s145, %s148
      %p154 = scmp.eq.s32.totalorder %s17, 0
      %p155 = por %p153, %p154
      %p156 = scmp.ne.s32.totalorder %s145, %s148
      %p157 = scmp.eq.s32.totalorder %s22, 1
      %p158 = por %p156, %p157
      %p159 = scmp.ne.s32.totalorder %s148, %s149
      %p160 = scmp.eq.s32.totalorder %s22, 0
      %p161 = por %p159, %p160
      %p162 = scmp.ne.s32.totalorder %s148, %s149
      %p163 = scmp.eq.s32.totalorder %s23, 1
      %p164 = por %p162, %p163
      %p166 = scmp.ne.s32.totalorder %s149, %s165
      %p167 = scmp.eq.s32.totalorder %s23, 0
      %p168 = por %p166, %p167
      %p169 = scmp.le.s32.totalorder 1, %s17
      %p170 = scmp.lt.s32.totalorder %s17, 3
      %p171 = pnand %p169, %p170
      %p172 = pneg %p171
      // Predicated region
      $region9: #{tpu_custom_call.1} parent=5 // pred_check
        _
      $region10: #{tpu_custom_call.1} parent=5 // pred_check_branch
        %174 = sbr.rel (%p171) target = $region12
      $region11: #{tpu_custom_call.1} parent=5 // pred_region
        %s175 = ssub.s32 %s17, 1
        // Predicated region
        $region13: #{tpu_custom_call.1} parent=11 // pred_check
          %p176 = pneg %p81
        $region14: #{tpu_custom_call.1} parent=11 // pred_check_branch
          %178 = sbr.rel (%p176) target = $region16
        $region15: #{tpu_custom_call.1} parent=11 // pred_region
          %s180 = ssub.s32 4096, 4096
          %181 = vsyncadd [#allocation6], %s180
          %s182 = smul.addr %s26, 128
          %s183 = scalar_lea.hbm %s1, %s182
          %s184 = sshll.u32 [#allocation5], 4
          %s185 = int_to_ptr.vmem [resolvable:$true] %s184
          %190 = dma.hbm_to_vmem [thread:$0]  %s183, 4096, %s185, [#allocation6], 128, 128, 8
        $region16: #{tpu_custom_call.1} parent=11 // pred_fallthru
          _
        // Predicated region
        $region17: #{tpu_custom_call.1} parent=11 // pred_check
          %p191 = pneg %p133
        $region18: #{tpu_custom_call.1} parent=11 // pred_check_branch
          %193 = sbr.rel (%p191) target = $region20
        $region19: #{tpu_custom_call.1} parent=11 // pred_region
          %s195 = ssub.s32 384, 384
          %196 = vsyncadd [#allocation6], %s195
          %s197 = smul.addr %s26, 128
          %s198 = scalar_lea.hbm %s3, %s197
          %s199 = sshll.u32 [#allocation8], 4
          %s200 = int_to_ptr.vmem [resolvable:$true] %s199
          %205 = dma.hbm_to_vmem [thread:$0]  %s198, 384, %s200, [#allocation6], 128, 128, 8
        $region20: #{tpu_custom_call.1} parent=11 // pred_fallthru
          _
      $region12: #{tpu_custom_call.1} parent=5 // pred_fallthru
        _
      %p206 = scmp.lt.s32.totalorder %s17, 2
      // Predicated region
      $region21: #{tpu_custom_call.1} parent=5 // pred_check
        %p207 = pneg %p206
      $region22: #{tpu_custom_call.1} parent=5 // pred_check_branch
        %209 = sbr.rel (%p207) target = $region24
      $region23: #{tpu_custom_call.1} parent=5 // pred_region
        // Predicated region
        $region25: #{tpu_custom_call.1} parent=23 // pred_check
          %p210 = pneg %p49
        $region26: #{tpu_custom_call.1} parent=23 // pred_check_branch
          %212 = sbr.rel (%p210) target = $region28
        $region27: #{tpu_custom_call.1} parent=23 // pred_region
          %s213 = sand.u32 %s17, 1
          %s214 = scalar_lea.sflag [#allocation3], %s213
          %s215 = sand.u32 %s39, 1
          %s216 = smul.addr %s215, 16
          %s217 = scalar_lea.vmem [#allocation2], %s216
          %s219 = ssub.s32 256, 256
          %220 = vsyncadd %s214, %s219
          %s221 = smul.addr %s25, 2
          %s222 = smul.addr %s221, 128
          %s223 = scalar_lea.hbm %s0, %s222
          %s225 = sshll.u32 %s217, 4
          %s226 = int_to_ptr.vmem [resolvable:$true] %s225
          %228 = dma.hbm_to_vmem [thread:$0]  %s223, 256, %s226, %s214
        $region28: #{tpu_custom_call.1} parent=23 // pred_fallthru
          _
        // Predicated region
        $region29: #{tpu_custom_call.1} parent=23 // pred_check
          %p229 = pneg %p101
        $region30: #{tpu_custom_call.1} parent=23 // pred_check_branch
          %231 = sbr.rel (%p229) target = $region32
        $region31: #{tpu_custom_call.1} parent=23 // pred_region
          %s232 = sand.u32 %s17, 1
          %s233 = scalar_lea.sflag [#allocation3], %s232
          %s234 = sand.u32 %s91, 1
          %s235 = smul.addr %s234, 8
          %s236 = scalar_lea.vmem [#allocation7], %s235
          %s238 = ssub.s32 128, 128
          %239 = vsyncadd %s233, %s238
          %s240 = smul.addr %s25, 128
          %s241 = scalar_lea.hbm %s2, %s240
          %s243 = sshll.u32 %s236, 4
          %s244 = int_to_ptr.vmem [resolvable:$true] %s243
          %246 = dma.hbm_to_vmem [thread:$0]  %s241, 128, %s244, %s233
        $region32: #{tpu_custom_call.1} parent=23 // pred_fallthru
          _
      $region24: #{tpu_custom_call.1} parent=5 // pred_fallthru
        _
      %p247 = scmp.le.s32.totalorder 1, %s17
      %p248 = scmp.lt.s32.totalorder %s17, 3
      %p249 = pnand %p247, %p248
      %p250 = pneg %p249
      // Predicated region
      $region33: #{tpu_custom_call.1} parent=5 // pred_check
        _
      $region34: #{tpu_custom_call.1} parent=5 // pred_check_branch
        %252 = sbr.rel (%p249) target = $region36
      $region35: #{tpu_custom_call.1} parent=5 // pred_region
        %s253 = ssub.s32 %s17, 1
        %s254 = sand.u32 %s22, 1
        %s255 = scalar_lea.sflag [#allocation3], %s254
        %s256 = sand.u32 %s42, 1
        %s257 = smul.addr %s256, 16
        %s258 = scalar_lea.vmem [#allocation2], %s257
        // Predicated region
        $region37: #{tpu_custom_call.1} parent=35 // pred_check
          %p259 = pneg %p55
        $region38: #{tpu_custom_call.1} parent=35 // pred_check_branch
          %261 = sbr.rel (%p259) target = $region40
        $region39: #{tpu_custom_call.1} parent=35 // pred_region
          %262 = dma.done %s255, 256
        $region40: #{tpu_custom_call.1} parent=35 // pred_fallthru
          _
        // Predicated region
        $region41: #{tpu_custom_call.1} parent=35 // pred_check
          %p263 = pneg %p81
        $region42: #{tpu_custom_call.1} parent=35 // pred_check_branch
          %265 = sbr.rel (%p263) target = $region44
        $region43: #{tpu_custom_call.1} parent=35 // pred_region
          %266 = dma.done [#allocation6], 4096
        $region44: #{tpu_custom_call.1} parent=35 // pred_fallthru
          _
        %s267 = sand.u32 %s22, 1
        %s268 = scalar_lea.sflag [#allocation3], %s267
        %s269 = sand.u32 %s94, 1
        %s270 = smul.addr %s269, 8
        %s271 = scalar_lea.vmem [#allocation7], %s270
        // Predicated region
        $region45: #{tpu_custom_call.1} parent=35 // pred_check
          %p272 = pneg %p107
        $region46: #{tpu_custom_call.1} parent=35 // pred_check_branch
          %274 = sbr.rel (%p272) target = $region48
        $region47: #{tpu_custom_call.1} parent=35 // pred_region
          %275 = dma.done %s268, 128
        $region48: #{tpu_custom_call.1} parent=35 // pred_fallthru
          _
        // Predicated region
        $region49: #{tpu_custom_call.1} parent=35 // pred_check
          %p276 = pneg %p133
        $region50: #{tpu_custom_call.1} parent=35 // pred_check_branch
          %278 = sbr.rel (%p276) target = $region52
        $region51: #{tpu_custom_call.1} parent=35 // pred_region
          %279 = dma.done [#allocation6], 384
        $region52: #{tpu_custom_call.1} parent=35 // pred_fallthru
          _
        %s280 = sand.u32 %s22, 1
        %s281 = scalar_lea.sflag [#allocation3], %s280
        %s282 = sand.u32 %s42, 1
        %s283 = smul.addr %s282, 16
        %s284 = scalar_lea.vmem [#allocation2], %s283
        %p285 = pneg %p55
        %p286 = pneg %p52
        %p287 = pneg %p81
        %p288 = pneg %p78
        %s289 = sand.u32 %s22, 1
        %s290 = scalar_lea.sflag [#allocation3], %s289
        %s291 = sand.u32 %s94, 1
        %s292 = smul.addr %s291, 8
        %s293 = scalar_lea.vmem [#allocation7], %s292
        %p294 = pneg %p107
        %p295 = pneg %p104
        %p296 = pneg %p133
        %p297 = pneg %p130
        %p298 = pneg %p161
        %p299 = pneg %p158
        %s300 = sand.u32 %s148, 1
        %s301 = scalar_lea.sflag [#allocation4], %s300
        %s302 = sand.u32 %s148, 1
        %s303 = smul.addr %s302, 8
        %s304 = scalar_lea.vmem [#allocation9], %s303
        %v305 = vld [vmem:[%s258] sm:$0xff]
        %v306 = vld [vmem:[%s258 + $0x8] sm:$0xff]
        %v307 = vld [vmem:[#allocation5] sm:$0xff]
        %v308 = vld [vmem:[#allocation5 + $0x8] sm:$0xff]
        %v309 = vld [vmem:[#allocation5 + $0x10] sm:$0xff]
        %v310 = vld [vmem:[#allocation5 + $0x18] sm:$0xff]
        %v311 = vld [vmem:[#allocation5 + $0x20] sm:$0xff]
        %v312 = vld [vmem:[#allocation5 + $0x28] sm:$0xff]
        %v313 = vld [vmem:[#allocation5 + $0x30] sm:$0xff]
        %v314 = vld [vmem:[#allocation5 + $0x38] sm:$0xff]
        %v315 = vld [vmem:[#allocation5 + $0x40] sm:$0xff]
        %v316 = vld [vmem:[#allocation5 + $0x48] sm:$0xff]
        %v317 = vld [vmem:[#allocation5 + $0x50] sm:$0xff]
        %v318 = vld [vmem:[#allocation5 + $0x58] sm:$0xff]
        %v319 = vld [vmem:[#allocation5 + $0x60] sm:$0xff]
        %v320 = vld [vmem:[#allocation5 + $0x68] sm:$0xff]
        %v321 = vld [vmem:[#allocation5 + $0x70] sm:$0xff]
        %v322 = vld [vmem:[#allocation5 + $0x78] sm:$0xff]
        %v323 = vld [vmem:[#allocation5 + $0x80] sm:$0xff]
        %v324 = vld [vmem:[#allocation5 + $0x88] sm:$0xff]
        %v325 = vld [vmem:[#allocation5 + $0x90] sm:$0xff]
        %v326 = vld [vmem:[#allocation5 + $0x98] sm:$0xff]
        %v327 = vld [vmem:[#allocation5 + $0xa0] sm:$0xff]
        %v328 = vld [vmem:[#allocation5 + $0xa8] sm:$0xff]
        %v329 = vld [vmem:[#allocation5 + $0xb0] sm:$0xff]
        %v330 = vld [vmem:[#allocation5 + $0xb8] sm:$0xff]
        %v331 = vld [vmem:[#allocation5 + $0xc0] sm:$0xff]
        %v332 = vld [vmem:[#allocation5 + $0xc8] sm:$0xff]
        %v333 = vld [vmem:[#allocation5 + $0xd0] sm:$0xff]
        %v334 = vld [vmem:[#allocation5 + $0xd8] sm:$0xff]
        %v335 = vld [vmem:[#allocation5 + $0xe0] sm:$0xff]
        %v336 = vld [vmem:[#allocation5 + $0xe8] sm:$0xff]
        %v337 = vld [vmem:[#allocation5 + $0xf0] sm:$0xff]
        %v338 = vld [vmem:[#allocation5 + $0xf8] sm:$0xff]
        %v339 = vld [vmem:[#allocation8] sm:$0xff]
        %v340 = vld [vmem:[#allocation8 + $0x8] sm:$0xff]
        %v341 = vld [vmem:[#allocation8 + $0x10] sm:$0xff]
        %v342 = vlaneseq
        %v343 = vshrl.u32 %v342, 7
        %v344 = vsub.s32 3, %v343
        %v345 = vrot.slane %v341, %v344
        %346 = vmatprep.subr.mxu0 0.0
        %347 = vmatpush1.msra.mxu0 %v322
        %348 = vmatprep.subr.mxu0 0.0
        %349 = vmatpush1.msra.mxu0 %v321
        %350 = vmatprep.subr.mxu0 0.0
        %351 = vmatpush1.msra.mxu0 %v320
        %352 = vmatprep.subr.mxu0 0.0
        %353 = vmatpush1.msra.mxu0 %v319
        %354 = vmatprep.subr.mxu0 0.0
        %355 = vmatpush1.msra.mxu0 %v318
        %356 = vmatprep.subr.mxu0 0.0
        %357 = vmatpush1.msra.mxu0 %v317
        %358 = vmatprep.subr.mxu0 0.0
        %359 = vmatpush1.msra.mxu0 %v316
        %360 = vmatprep.subr.mxu0 0.0
        %361 = vmatpush1.msra.mxu0 %v315
        %362 = vmatprep.subr.mxu0 0.0
        %363 = vmatpush1.msra.mxu0 %v314
        %364 = vmatprep.subr.mxu0 0.0
        %365 = vmatpush1.msra.mxu0 %v313
        %366 = vmatprep.subr.mxu0 0.0
        %367 = vmatpush1.msra.mxu0 %v312
        %368 = vmatprep.subr.mxu0 0.0
        %369 = vmatpush1.msra.mxu0 %v311
        %370 = vmatprep.subr.mxu0 0.0
        %371 = vmatpush1.msra.mxu0 %v310
        %372 = vmatprep.subr.mxu0 0.0
        %373 = vmatpush1.msra.mxu0 %v309
        %374 = vmatprep.subr.mxu0 0.0
        %375 = vmatpush1.msra.mxu0 %v308
        %376 = vmatprep.subr.mxu0 0.0
        %377 = vmatpush1.msra.mxu0 %v307
        %378 = vmatprep.subr.mxu0 0.0
        %379 = vmatpush2.msra.mxu0 %v338
        %380 = vmatprep.subr.mxu0 0.0
        %381 = vmatpush2.msra.mxu0 %v337
        %382 = vmatprep.subr.mxu0 0.0
        %383 = vmatpush2.msra.mxu0 %v336
        %384 = vmatprep.subr.mxu0 0.0
        %385 = vmatpush2.msra.mxu0 %v335
        %386 = vmatprep.subr.mxu0 0.0
        %387 = vmatpush2.msra.mxu0 %v334
        %388 = vmatprep.subr.mxu0 0.0
        %389 = vmatpush2.msra.mxu0 %v333
        %390 = vmatprep.subr.mxu0 0.0
        %391 = vmatpush2.msra.mxu0 %v332
        %392 = vmatprep.subr.mxu0 0.0
        %393 = vmatpush2.msra.mxu0 %v331
        %394 = vmatprep.subr.mxu0 0.0
        %395 = vmatpush2.msra.mxu0 %v330
        %396 = vmatprep.subr.mxu0 0.0
        %397 = vmatpush2.msra.mxu0 %v329
        %398 = vmatprep.subr.mxu0 0.0
        %399 = vmatpush2.msra.mxu0 %v328
        %400 = vmatprep.subr.mxu0 0.0
        %401 = vmatpush2.msra.mxu0 %v327
        %402 = vmatprep.subr.mxu0 0.0
        %403 = vmatpush2.msra.mxu0 %v326
        %404 = vmatprep.subr.mxu0 0.0
        %405 = vmatpush2.msra.mxu0 %v325
        %406 = vmatprep.subr.mxu0 0.0
        %407 = vmatpush2.msra.mxu0 %v324
        %408 = vmatprep.subr.mxu0 0.0
        %409 = vmatpush2.msra.mxu0 %v323
        %410 = vmatprep.mubr.f32.mxu0 %v306
        %411 = vmatmul.mubr.f32.gmra.mxu0 %v305
        %v412 = vpop.f32.mrf.mxu0
        %v413 = vadd.f32 %v345, %v412
        %v414 = vpop.f32.mrf.mxu0
        %415 = vdwg.mxu0
        %v416 = vsub.f32 1.0, %v341
        %v417 = vld [vmem:[%s271] sm:$0xff]
        %419 = vset.pattern.permute.xlu0 0
        %420 = vperm.xlu0 %419, %v417
        %v421 = vpop.permute.xlu0 %420
        %v423 = vlaneseq
        %v424 = vshrl.u32 %v423, 7
        %v425 = vsub.s32 0, %v424
        %v426 = vrot.slane %v339, %v425
        %v427 = vsub.f32 %v421, %v426
        %v428 = vand.u32 2147483647, %v427
        %429 = vset.pattern.permute.xlu0 1
        %430 = vperm.xlu0 %429, %v417
        %v431 = vpop.permute.xlu0 %430
        %v433 = vlaneseq
        %v434 = vshrl.u32 %v433, 7
        %v435 = vsub.s32 1, %v434
        %v436 = vrot.slane %v339, %v435
        %v437 = vsub.f32 %v431, %v436
        %v438 = vand.u32 2147483647, %v437
        %v439 = vadd.f32 %v428, %v438
        %440 = vset.pattern.permute.xlu0 2
        %441 = vperm.xlu0 %440, %v417
        %v442 = vpop.permute.xlu0 %441
        %v444 = vlaneseq
        %v445 = vshrl.u32 %v444, 7
        %v446 = vsub.s32 2, %v445
        %v447 = vrot.slane %v339, %v446
        %v448 = vsub.f32 %v442, %v447
        %v449 = vand.u32 2147483647, %v448
        %v450 = vadd.f32 %v439, %v449
        %451 = vset.pattern.permute.xlu0 3
        %452 = vperm.xlu0 %451, %v417
        %v453 = vpop.permute.xlu0 %452
        %v455 = vlaneseq
        %v456 = vshrl.u32 %v455, 7
        %v457 = vsub.s32 3, %v456
        %v458 = vrot.slane %v339, %v457
        %v459 = vsub.f32 %v453, %v458
        %v460 = vand.u32 2147483647, %v459
        %v461 = vadd.f32 %v450, %v460
        %462 = vset.pattern.permute.xlu0 6
        %463 = vperm.xlu0 %462, %v417
        %v464 = vpop.permute.xlu0 %463
        %v466 = vlaneseq
        %v467 = vshrl.u32 %v466, 7
        %v468 = vsub.s32 6, %v467
        %v469 = vrot.slane %v339, %v468
        %v470 = vmin.f32 %v464, %v469
        %471 = vset.pattern.permute.xlu0 4
        %472 = vperm.xlu0 %471, %v417
        %v473 = vpop.permute.xlu0 %472
        %v475 = vlaneseq
        %v476 = vshrl.u32 %v475, 7
        %v477 = vsub.s32 4, %v476
        %v478 = vrot.slane %v339, %v477
        %v479 = vmax.f32 %v473, %v478
        %v480 = vsub.f32 %v470, %v479
        %v481 = vmax.f32 %v480, 0.0
        %482 = vset.pattern.permute.xlu0 7
        %483 = vperm.xlu0 %482, %v417
        %v484 = vpop.permute.xlu0 %483
        %v486 = vlaneseq
        %v487 = vshrl.u32 %v486, 7
        %v488 = vsub.s32 7, %v487
        %v489 = vrot.slane %v339, %v488
        %v490 = vmin.f32 %v484, %v489
        %491 = vset.pattern.permute.xlu0 5
        %492 = vperm.xlu0 %491, %v417
        %v493 = vpop.permute.xlu0 %492
        %v495 = vlaneseq
        %v496 = vshrl.u32 %v495, 7
        %v497 = vsub.s32 5, %v496
        %v498 = vrot.slane %v339, %v497
        %v499 = vmax.f32 %v493, %v498
        %v500 = vsub.f32 %v490, %v499
        %v501 = vmax.f32 %v500, 0.0
        %v502 = vmul.f32 %v481, %v501
        %503 = vset.pattern.permute.xlu0 8
        %504 = vperm.xlu0 %503, %v417
        %v505 = vpop.permute.xlu0 %504
        %v507 = vlaneseq
        %v508 = vshrl.u32 %v507, 7
        %v509 = vsub.s32 0, %v508
        %v510 = vrot.slane %v340, %v509
        %v511 = vadd.f32 %v505, %v510
        %v512 = vsub.f32 %v511, %v502
        %v513 = vmax.f32 %v464, %v469
        %v514 = vmin.f32 %v473, %v478
        %v515 = vsub.f32 %v513, %v514
        %v516 = vmax.f32 %v484, %v489
        %v517 = vmin.f32 %v493, %v498
        %v518 = vsub.f32 %v516, %v517
        %v519 = vmax.f32 %v515, 0.0
        %v520 = vmax.f32 %v518, 0.0
        %v521 = vmul.f32 %v519, %v520
        %v522 = vmul.f32 %v502, %v521
        %v523 = vsub.f32 %v521, %v512
        %v524 = vmul.f32 %v523, %v512
        %v525 = vsub.f32 %v522, %v524
        %v526 = vmul.f32 %v512, %v521
        %v527 = vrcp.pop %v526
        %v528 = vmul.f32 %v525, %v527
        %529 = vset.pattern.permute.xlu0 9
        %530 = vperm.xlu0 %529, %v417
        %v531 = vpop.permute.xlu0 %530
        %v533 = vlaneseq
        %v534 = vshrl.u32 %v533, 7
        %v535 = vsub.s32 1, %v534
        %v536 = vrot.slane %v340, %v535
        %v537 = vsub.f32 %v531, %v536
        %v538 = vand.u32 2147483647, %v537
        %539 = vset.pattern.permute.xlu0 10
        %540 = vperm.xlu0 %539, %v417
        %v541 = vpop.permute.xlu0 %540
        %v543 = vlaneseq
        %v544 = vshrl.u32 %v543, 7
        %v545 = vsub.s32 2, %v544
        %v546 = vrot.slane %v340, %v545
        %v547 = vsub.f32 %v541, %v546
        %v548 = vand.u32 2147483647, %v547
        %v549 = vadd.f32 %v538, %v548
        %550 = vset.pattern.permute.xlu0 11
        %551 = vperm.xlu0 %550, %v417
        %v552 = vpop.permute.xlu0 %551
        %v554 = vlaneseq
        %v555 = vshrl.u32 %v554, 7
        %v556 = vsub.s32 3, %v555
        %v557 = vrot.slane %v340, %v556
        %v558 = vsub.f32 %v552, %v557
        %v559 = vand.u32 2147483647, %v558
        %v560 = vadd.f32 %v549, %v559
        %561 = vset.pattern.permute.xlu0 12
        %562 = vperm.xlu0 %561, %v417
        %v563 = vpop.permute.xlu0 %562
        %v565 = vlaneseq
        %v566 = vshrl.u32 %v565, 7
        %v567 = vsub.s32 4, %v566
        %v568 = vrot.slane %v340, %v567
        %v569 = vsub.f32 %v563, %v568
        %v570 = vand.u32 2147483647, %v569
        %v571 = vadd.f32 %v560, %v570
        %572 = vset.pattern.permute.xlu0 15
        %573 = vperm.xlu0 %572, %v417
        %v574 = vpop.permute.xlu0 %573
        %v576 = vlaneseq
        %v577 = vshrl.u32 %v576, 7
        %v578 = vsub.s32 7, %v577
        %v579 = vrot.slane %v340, %v578
        %v580 = vmin.f32 %v574, %v579
        %581 = vset.pattern.permute.xlu0 13
        %582 = vperm.xlu0 %581, %v417
        %v583 = vpop.permute.xlu0 %582
        %v585 = vlaneseq
        %v586 = vshrl.u32 %v585, 7
        %v587 = vsub.s32 5, %v586
        %v588 = vrot.slane %v340, %v587
        %v589 = vmax.f32 %v583, %v588
        %v590 = vsub.f32 %v580, %v589
        %v591 = vmax.f32 %v590, 0.0
        %592 = vset.pattern.permute.xlu0 16
        %593 = vperm.xlu0 %592, %v417
        %v594 = vpop.permute.xlu0 %593
        %v596 = vlaneseq
        %v597 = vshrl.u32 %v596, 7
        %v598 = vsub.s32 0, %v597
        %v599 = vrot.slane %v341, %v598
        %v600 = vmin.f32 %v594, %v599
        %601 = vset.pattern.permute.xlu0 14
        %602 = vperm.xlu0 %601, %v417
        %v603 = vpop.permute.xlu0 %602
        %v605 = vlaneseq
        %v606 = vshrl.u32 %v605, 7
        %v607 = vsub.s32 6, %v606
        %v608 = vrot.slane %v340, %v607
        %v609 = vmax.f32 %v603, %v608
        %v610 = vsub.f32 %v600, %v609
        %v611 = vmax.f32 %v610, 0.0
        %v612 = vmul.f32 %v591, %v611
        %613 = vset.pattern.permute.xlu0 17
        %614 = vperm.xlu0 %613, %v417
        %v615 = vpop.permute.xlu0 %614
        %v617 = vlaneseq
        %v618 = vshrl.u32 %v617, 7
        %v619 = vsub.s32 1, %v618
        %v620 = vrot.slane %v341, %v619
        %v621 = vadd.f32 %v615, %v620
        %v622 = vsub.f32 %v621, %v612
        %v623 = vmax.f32 %v574, %v579
        %v624 = vmin.f32 %v583, %v588
        %v625 = vsub.f32 %v623, %v624
        %v626 = vmax.f32 %v594, %v599
        %v627 = vmin.f32 %v603, %v608
        %v628 = vsub.f32 %v626, %v627
        %v629 = vmax.f32 %v625, 0.0
        %v630 = vmax.f32 %v628, 0.0
        %v631 = vmul.f32 %v629, %v630
        %v632 = vmul.f32 %v612, %v631
        %v633 = vsub.f32 %v631, %v622
        %v634 = vmul.f32 %v633, %v622
        %v635 = vsub.f32 %v632, %v634
        %v636 = vmul.f32 %v622, %v631
        %v637 = vrcp.pop %v636
        %v638 = vmul.f32 %v635, %v637
        %v639 = vlaneseq
        %v640 = vshrl.u32 %v639, 7
        %v641 = vsub.s32 2, %v640
        %v642 = vrot.slane %v341, %v641
        %v643 = vmul.f32 %v571, %v642
        %v644 = vmax.f32 %v461, %v643
        %v645 = vadd.f32 %v413, %v644
        %v646 = vsub.f32 0.0, %v528
        %v647 = vsub.f32 0.0, %v638
        %v648 = vlaneseq
        %v649 = vshrl.u32 %v648, 7
        %v650 = vsub.s32 2, %v649
        %v651 = vrot.slane %v416, %v650
        %v652 = vmul.f32 %v646, %v651
        %v653 = vadd.f32 %v647, %v652
        %v654 = vmax.f32 %v646, %v653
        %v655 = vadd.f32 %v645, %v654
        %656 = vst [vmem:[%s304] sm:$0xff] %v655
        %s657 = sand.u32 %s148, 1
        %s658 = scalar_lea.sflag [#allocation4], %s657
        %s659 = sand.u32 %s148, 1
        %s660 = smul.addr %s659, 8
        %s661 = scalar_lea.vmem [#allocation9], %s660
        // Predicated region
        $region53: #{tpu_custom_call.1} parent=35 // pred_check
          %p662 = pneg %p158
        $region54: #{tpu_custom_call.1} parent=35 // pred_check_branch
          %664 = sbr.rel (%p662) target = $region56
        $region55: #{tpu_custom_call.1} parent=35 // pred_region
          %s666 = ssub.s32 128, 128
          %667 = vsyncadd %s658, %s666
          %s668 = sadd.s32 %s26, %s27
          %s669 = smul.addr %s668, 128
          %s670 = scalar_lea.hbm %s4, %s669
          %s672 = sshll.u32 %s661, 4
          %s673 = int_to_ptr.vmem [resolvable:$true] %s672
          %675 = dma.vmem_to_hbm [thread:$0]  %s673, 128, %s670, %s658
        $region56: #{tpu_custom_call.1} parent=35 // pred_fallthru
          _
      $region36: #{tpu_custom_call.1} parent=5 // pred_fallthru
        _
      %p676 = scmp.le.s32.totalorder 2, %s17
      // Predicated region
      $region57: #{tpu_custom_call.1} parent=5 // pred_check
        %p677 = pneg %p676
      $region58: #{tpu_custom_call.1} parent=5 // pred_check_branch
        %679 = sbr.rel (%p677) target = $region60
      $region59: #{tpu_custom_call.1} parent=5 // pred_region
        %s680 = ssub.s32 %s17, 2
        // Predicated region
        $region61: #{tpu_custom_call.1} parent=59 // pred_check
          %p681 = pneg %p164
        $region62: #{tpu_custom_call.1} parent=59 // pred_check_branch
          %683 = sbr.rel (%p681) target = $region64
        $region63: #{tpu_custom_call.1} parent=59 // pred_region
          %s684 = sand.u32 %s149, 1
          %s685 = scalar_lea.sflag [#allocation4], %s684
          %s686 = sand.u32 %s149, 1
          %s687 = smul.addr %s686, 8
          %s688 = scalar_lea.vmem [#allocation9], %s687
          %689 = dma.done %s685, 128
        $region64: #{tpu_custom_call.1} parent=59 // pred_fallthru
          _
      $region60: #{tpu_custom_call.1} parent=5 // pred_fallthru
        _
    $region6: #{tpu_custom_call.1} parent=1 // loop_footer
      %s21 = sadd.s32 1, %s17
    $region7: #{tpu_custom_call.1} parent=1 // loop_footer_branch
      %16 = sbr.rel target = $region3
    $region8: #{tpu_custom_call.1} parent=1 // loop_exit
      _
    %690 = vsyncpa [#allocation3], 1
    %s691 = scalar_lea.sflag [#allocation3], 1
    %692 = vsyncpa %s691, 1
    %693 = vsyncpa [#allocation6], 1
    %694 = vsyncpa [#allocation4], 1
    %s695 = scalar_lea.sflag [#allocation4], 1
    %696 = vsyncpa %s695, 1

</llo_original>
